<compile_context>
chip_gen: v5e
topology: v5e:2x2
jax: 0.10.0
libtpu: 0.0.40
codegen_flags: <defaults>
</compile_context>

<pallas_src>
import jax
import jax.numpy as jnp
from jax import lax
from jax.experimental import pallas as pl
from jax.experimental.pallas import tpu as pltpu


# ---------------- Pallas kernel ----------------

def _fused_attention_kernel(x_ref, wq_ref, wk_ref, wv_ref, bqkv_ref,
                            wo_ref, bo_ref, o_ref, acc_ref):
    """One (batch, head) grid step: fused qkv-proj -> softmax(q k^T) v -> out-proj part.

    x_ref:    (1, N, D)   activations for batch b (f32; cast to bf16 for the MXU)
    wq/wk/wv: (1, D, dh)  per-head projection weights (bf16; scale folded into wq)
    bqkv_ref: (1, 3, dh)  per-head q/k/v biases (f32; zeros when qkv_bias=False)
    wo_ref:   (1, dh, D)  per-head slice of the output projection (bf16)
    bo_ref:   (1, D)      output-projection bias (f32)
    o_ref:    (1, N, D)   output block (VMEM-resident across the heads axis)
    acc_ref:  (N, D) f32  accumulator for per-head out-projection partials
    """
    h = pl.program_id(1)

    x = x_ref[0].astype(jnp.bfloat16)                                   # (N, D)
    b3 = bqkv_ref[0]                                                    # (3, dh) f32

    # Fused per-head QKV projection (softmax scale already folded into wq / b_q).
    q = jnp.dot(x, wq_ref[0], preferred_element_type=jnp.float32) + b3[0:1, :]
    k = jnp.dot(x, wk_ref[0], preferred_element_type=jnp.float32) + b3[1:2, :]
    v = jnp.dot(x, wv_ref[0], preferred_element_type=jnp.float32) + b3[2:3, :]

    # q @ k^T without materializing a transpose: contract both last dims (bf16 in, f32 out).
    dots = lax.dot_general(q.astype(jnp.bfloat16), k.astype(jnp.bfloat16),
                           (((1,), (1,)), ((), ())),
                           preferred_element_type=jnp.float32)          # (N, N)

    # Numerically stable softmax; statistics stay in f32 (VPU/EUP).
    dots = dots - jnp.max(dots, axis=-1, keepdims=True)
    p = jnp.exp(dots)
    inv = pl.reciprocal(jnp.sum(p, axis=-1, keepdims=True), approx=True)  # (N, 1)

    ctx = jnp.dot(p.astype(jnp.bfloat16), v.astype(jnp.bfloat16),
                  preferred_element_type=jnp.float32) * inv             # (N, dh) f32

    # Per-head slice of the output projection, accumulated across heads (no lane concat).
    part = jnp.dot(ctx.astype(jnp.bfloat16), wo_ref[0],
                   preferred_element_type=jnp.float32)                  # (N, D) f32

    @pl.when(h == 0)
    def _():
        acc_ref[...] = jnp.zeros_like(acc_ref)

    acc_ref[...] += part

    @pl.when(h == pl.num_programs(1) - 1)
    def _():
        o_ref[0] = (acc_ref[...] + bo_ref[...]).astype(o_ref.dtype)


# ---------------- wrappers ----------------

def prepare_attention_params(w_qkv, b_qkv, w_out, b_out, heads, dim_head):
    """One-time parameter preparation (do at load time, not per forward call):
       split weights per head (heads become a grid axis -> pure DMA indexing),
       fold the softmax scale into the q projection, pre-cast matmul weights to bf16."""
    D = heads * dim_head
    scale = dim_head ** (-0.5)
    # to_qkv output columns are ordered (split=3, heads, dim_head).
    w3 = w_qkv.reshape(D, 3, heads, dim_head)
    w_q = jnp.transpose(w3[:, 0], (1, 0, 2)) * scale            # (heads, D, dh), scaled
    w_k = jnp.transpose(w3[:, 1], (1, 0, 2))                    # (heads, D, dh)
    w_v = jnp.transpose(w3[:, 2], (1, 0, 2))                    # (heads, D, dh)
    b3 = b_qkv.reshape(3, heads, dim_head).at[0].multiply(scale)
    b_qkv_h = jnp.transpose(b3, (1, 0, 2))                      # (heads, 3, dh)
    w_out_h = w_out.reshape(heads, dim_head, D)                 # (heads, dh, D)
    return dict(
        w_q=w_q.astype(jnp.bfloat16),
        w_k=w_k.astype(jnp.bfloat16),
        w_v=w_v.astype(jnp.bfloat16),
        b_qkv=b_qkv_h.astype(jnp.float32),
        w_out=w_out_h.astype(jnp.bfloat16),
        b_out=b_out.reshape(1, D).astype(jnp.float32),
    )


def attention_forward(x, params, heads, dim_head):
    """Equivalent of Attention.forward (eval mode, dropout=0, reattention=False)."""
    B, N, D = x.shape
    dh = dim_head
    # TODO(synk): for long sequences (N >~ 1-2k) add a query-tile grid axis with an
    # online-softmax (flash) update; the full (N, N) score tile is fine at ViT lengths.
    return pl.pallas_call(
        _fused_attention_kernel,
        out_shape=jax.ShapeDtypeStruct((B, N, D), x.dtype),
        grid=(B, heads),
        in_specs=[
            pl.BlockSpec((1, N, D), lambda b, h: (b, 0, 0)),      # x (re-used across h)
            pl.BlockSpec((1, D, dh), lambda b, h: (h, 0, 0)),     # w_q (scaled)
            pl.BlockSpec((1, D, dh), lambda b, h: (h, 0, 0)),     # w_k
            pl.BlockSpec((1, D, dh), lambda b, h: (h, 0, 0)),     # w_v
            pl.BlockSpec((1, 3, dh), lambda b, h: (h, 0, 0)),     # qkv biases
            pl.BlockSpec((1, dh, D), lambda b, h: (h, 0, 0)),     # w_out per-head slice
            pl.BlockSpec((1, D), lambda b, h: (0, 0)),            # b_out
        ],
        out_specs=pl.BlockSpec((1, N, D), lambda b, h: (b, 0, 0)),
        scratch_shapes=[pltpu.VMEM((N, D), jnp.float32)],
        compiler_params=pltpu.CompilerParams(
            # batch is megacore-parallel (v7x has 2 TCs); heads is the out-projection
            # accumulation axis, so it must stay "arbitrary".
            dimension_semantics=("parallel", "arbitrary"),
            # Re-derived for v7x's 64 MiB VMEM (bf16 x + per-head weights + (N,N) f32
            # scores + (N,D) f32 accumulator); well under the limit with headroom.
            vmem_limit_bytes=40 * 1024 * 1024,
        ),
    )(x, params['w_q'], params['w_k'], params['w_v'], params['b_qkv'],
      params['w_out'], params['b_out'])


# ---------------- reference (pure JAX, f32) ----------------

def attention_ref(x, w_qkv, b_qkv, w_out, b_out, heads, dim_head):
    B, N, D = x.shape
    scale = dim_head ** (-0.5)
    qkv = x.reshape(B * N, D) @ w_qkv + b_qkv
    qkv = qkv.reshape(B, N, 3, heads, dim_head).transpose(2, 0, 3, 1, 4)
    q, k, v = qkv[0], qkv[1], qkv[2]
    dots = jnp.einsum('bhid,bhjd->bhij', q, k) * scale
    attn = jax.nn.softmax(dots, axis=-1)
    out = jnp.einsum('bhij,bhjd->bhid', attn, v)
    out = out.transpose(0, 2, 1, 3).reshape(B * N, D) @ w_out + b_out
    return out.reshape(B, N, D)


# ---------------- main ----------------

if __name__ == "__main__":
    # small shapes: batch=2, seq=8, dim=32, dim_head=8 -> heads=4
    B, N, D = 2, 8, 32
    dim_head = 8
    heads = D // dim_head

    key = jax.random.PRNGKey(0)
    kx, kq, ko, kb = jax.random.split(key, 4)

    x = jax.random.normal(kx, (B, N, D), dtype=jnp.float32)

    # to_qkv weight: normal(0, sqrt(2/(dim+dim_head))), no bias (qkv_bias=False)
    qkv_std = (2.0 / (D + dim_head)) ** 0.5
    w_qkv = (jax.random.normal(kq, (3 * D, D), dtype=jnp.float32) * qkv_std).T  # (D, 3D)
    b_qkv = jnp.zeros((3 * D,), dtype=jnp.float32)

    # to_out weight: xavier_normal, bias: small uniform init
    xavier_std = (2.0 / (D + D)) ** 0.5
    w_out = (jax.random.normal(ko, (D, D), dtype=jnp.float32) * xavier_std).T   # (D, D)
    b_out = jax.random.uniform(kb, (D,), dtype=jnp.float32,
                               minval=-(1.0 / D) ** 0.5, maxval=(1.0 / D) ** 0.5)

    # TODO(synk): training-mode dropout and the ReAttention branch are not implemented
    # (eval path with dropout=0, reattention=False only).
    params = prepare_attention_params(w_qkv, b_qkv, w_out, b_out, heads, dim_head)
    out = attention_forward(x, params, heads, dim_head)
    out = jax.block_until_ready(out)

    ref = attention_ref(x, w_qkv, b_qkv, w_out, b_out, heads, dim_head)
    assert out.shape == (B, N, D)
    # bf16 MXU operands + approx EUP reciprocal vs an all-f32 reference -> loose tolerance.
    assert jnp.allclose(out, ref, atol=5e-2, rtol=5e-2), "mismatch vs reference"

    print("KERNEL_OK")
</pallas_src>

<mosaic_0001>
module attributes {stable_mosaic.version = 11 : i64} {
  func.func @_fused_attention_kernel(%arg0: i32, %arg1: i32, %arg2: memref<1x8x32xf32, #tpu.memory_space<vmem>>, %arg3: memref<1x32x8xbf16, #tpu.memory_space<vmem>>, %arg4: memref<1x32x8xbf16, #tpu.memory_space<vmem>>, %arg5: memref<1x32x8xbf16, #tpu.memory_space<vmem>>, %arg6: memref<1x3x8xf32, #tpu.memory_space<vmem>>, %arg7: memref<1x8x32xbf16, #tpu.memory_space<vmem>>, %arg8: memref<1x32xf32, #tpu.memory_space<vmem>>, %arg9: memref<1x8x32xf32, #tpu.memory_space<vmem>>, %arg10: memref<8x32xf32, #tpu.memory_space<vmem>>) attributes {dimension_semantics = [#tpu.dimension_semantics<parallel>, #tpu.dimension_semantics<arbitrary>], iteration_bounds = array<i64: 2, 4>, scalar_prefetch = 0 : i64, scratch_operands = 1 : i64, tpu.core_type = #tpu.core_type<tc>, window_params = [{transform_indices = @transform_0, window_bounds = array<i64: 1, 8, 32>}, {transform_indices = @transform_1, window_bounds = array<i64: 1, 32, 8>}, {transform_indices = @transform_2, window_bounds = array<i64: 1, 32, 8>}, {transform_indices = @transform_3, window_bounds = array<i64: 1, 32, 8>}, {transform_indices = @transform_4, window_bounds = array<i64: 1, 3, 8>}, {transform_indices = @transform_5, window_bounds = array<i64: 1, 8, 32>}, {pipeline_mode = #tpu.pipeline_mode<synchronous>, transform_indices = @transform_6, window_bounds = array<i64: 1, 32>}, {transform_indices = @transform_7, window_bounds = array<i64: 1, 8, 32>}]} {
    %c0 = arith.constant 0 : index
    %c0_0 = arith.constant 0 : index
    %c0_1 = arith.constant 0 : index
    %0 = vector.load %arg2[%c0, %c0_0, %c0_1] : memref<1x8x32xf32, #tpu.memory_space<vmem>>, vector<1x8x32xf32>
    %1 = vector.shape_cast %0 : vector<1x8x32xf32> to vector<8x32xf32>
    %2 = arith.truncf %1 : vector<8x32xf32> to vector<8x32xbf16>
    %c0_2 = arith.constant 0 : index
    %c0_3 = arith.constant 0 : index
    %c0_4 = arith.constant 0 : index
    %3 = vector.load %arg6[%c0_2, %c0_3, %c0_4] : memref<1x3x8xf32, #tpu.memory_space<vmem>>, vector<1x3x8xf32>
    %4 = vector.shape_cast %3 : vector<1x3x8xf32> to vector<3x8xf32>
    %c0_5 = arith.constant 0 : index
    %c0_6 = arith.constant 0 : index
    %c0_7 = arith.constant 0 : index
    %5 = vector.load %arg3[%c0_5, %c0_6, %c0_7] : memref<1x32x8xbf16, #tpu.memory_space<vmem>>, vector<1x32x8xbf16>
    %6 = vector.shape_cast %5 : vector<1x32x8xbf16> to vector<32x8xbf16>
    %cst = arith.constant dense<0.000000e+00> : vector<8x8xf32>
    %7 = tpu.matmul %2, %6, %cst {dimension_numbers = #tpu.dot_dimension_numbers<[1], [0], [0], [1], [0, 0, 1, 1], [], []>} : vector<8x32xbf16>, vector<32x8xbf16>, vector<8x8xf32> -> vector<8x8xf32>
    %8 = vector.extract_strided_slice %4 {offsets = [0, 0], sizes = [1, 8], strides = [1, 1]} : vector<3x8xf32> to vector<1x8xf32>
    %9 = vector.broadcast %8 : vector<1x8xf32> to vector<8x8xf32>
    %10 = arith.addf %7, %9 : vector<8x8xf32>
    %c0_8 = arith.constant 0 : index
    %c0_9 = arith.constant 0 : index
    %c0_10 = arith.constant 0 : index
    %11 = vector.load %arg4[%c0_8, %c0_9, %c0_10] : memref<1x32x8xbf16, #tpu.memory_space<vmem>>, vector<1x32x8xbf16>
    %12 = vector.shape_cast %11 : vector<1x32x8xbf16> to vector<32x8xbf16>
    %cst_11 = arith.constant dense<0.000000e+00> : vector<8x8xf32>
    %13 = tpu.matmul %2, %12, %cst_11 {dimension_numbers = #tpu.dot_dimension_numbers<[1], [0], [0], [1], [0, 0, 1, 1], [], []>} : vector<8x32xbf16>, vector<32x8xbf16>, vector<8x8xf32> -> vector<8x8xf32>
    %14 = vector.extract_strided_slice %4 {offsets = [1, 0], sizes = [1, 8], strides = [1, 1]} : vector<3x8xf32> to vector<1x8xf32>
    %15 = vector.broadcast %14 : vector<1x8xf32> to vector<8x8xf32>
    %16 = arith.addf %13, %15 : vector<8x8xf32>
    %c0_12 = arith.constant 0 : index
    %c0_13 = arith.constant 0 : index
    %c0_14 = arith.constant 0 : index
    %17 = vector.load %arg5[%c0_12, %c0_13, %c0_14] : memref<1x32x8xbf16, #tpu.memory_space<vmem>>, vector<1x32x8xbf16>
    %18 = vector.shape_cast %17 : vector<1x32x8xbf16> to vector<32x8xbf16>
    %cst_15 = arith.constant dense<0.000000e+00> : vector<8x8xf32>
    %19 = tpu.matmul %2, %18, %cst_15 {dimension_numbers = #tpu.dot_dimension_numbers<[1], [0], [0], [1], [0, 0, 1, 1], [], []>} : vector<8x32xbf16>, vector<32x8xbf16>, vector<8x8xf32> -> vector<8x8xf32>
    %20 = vector.extract_strided_slice %4 {offsets = [2, 0], sizes = [1, 8], strides = [1, 1]} : vector<3x8xf32> to vector<1x8xf32>
    %21 = vector.broadcast %20 : vector<1x8xf32> to vector<8x8xf32>
    %22 = arith.addf %19, %21 : vector<8x8xf32>
    %23 = arith.truncf %10 : vector<8x8xf32> to vector<8x8xbf16>
    %24 = arith.truncf %16 : vector<8x8xf32> to vector<8x8xbf16>
    %cst_16 = arith.constant dense<0.000000e+00> : vector<8x8xf32>
    %25 = tpu.matmul %23, %24, %cst_16 {dimension_numbers = #tpu.dot_dimension_numbers<[1], [1], [0], [0], [0, 0, 1, 0], [], []>} : vector<8x8xbf16>, vector<8x8xbf16>, vector<8x8xf32> -> vector<8x8xf32>
    %cst_17 = arith.constant dense<0xFF800000> : vector<8xf32>
    %26 = vector.multi_reduction <maximumf>, %25, %cst_17 [1] : vector<8x8xf32> to vector<8xf32>
    %27 = vector.shape_cast %26 : vector<8xf32> to vector<8x1xf32>
    %28 = vector.broadcast %27 : vector<8x1xf32> to vector<8x8xf32>
    %29 = arith.subf %25, %28 : vector<8x8xf32>
    %30 = math.exp %29 : vector<8x8xf32>
    %cst_18 = arith.constant dense<0.000000e+00> : vector<8xf32>
    %31 = vector.multi_reduction <add>, %30, %cst_18 [1] : vector<8x8xf32> to vector<8xf32>
    %32 = vector.shape_cast %31 : vector<8xf32> to vector<8x1xf32>
    %33 = tpu.reciprocal %32 {approx = true} : vector<8x1xf32> -> vector<8x1xf32>
    %34 = arith.truncf %30 : vector<8x8xf32> to vector<8x8xbf16>
    %35 = arith.truncf %22 : vector<8x8xf32> to vector<8x8xbf16>
    %cst_19 = arith.constant dense<0.000000e+00> : vector<8x8xf32>
    %36 = tpu.matmul %34, %35, %cst_19 {dimension_numbers = #tpu.dot_dimension_numbers<[1], [0], [0], [1], [0, 0, 1, 1], [], []>} : vector<8x8xbf16>, vector<8x8xbf16>, vector<8x8xf32> -> vector<8x8xf32>
    %37 = vector.broadcast %33 : vector<8x1xf32> to vector<8x8xf32>
    %38 = arith.mulf %36, %37 : vector<8x8xf32>
    %39 = arith.truncf %38 : vector<8x8xf32> to vector<8x8xbf16>
    %c0_20 = arith.constant 0 : index
    %c0_21 = arith.constant 0 : index
    %c0_22 = arith.constant 0 : index
    %40 = vector.load %arg7[%c0_20, %c0_21, %c0_22] : memref<1x8x32xbf16, #tpu.memory_space<vmem>>, vector<1x8x32xbf16>
    %41 = vector.shape_cast %40 : vector<1x8x32xbf16> to vector<8x32xbf16>
    %cst_23 = arith.constant dense<0.000000e+00> : vector<8x32xf32>
    %42 = tpu.matmul %39, %41, %cst_23 {dimension_numbers = #tpu.dot_dimension_numbers<[1], [0], [0], [1], [0, 0, 1, 1], [], []>} : vector<8x8xbf16>, vector<8x32xbf16>, vector<8x32xf32> -> vector<8x32xf32>
    %c0_i32 = arith.constant 0 : i32
    %43 = arith.cmpi eq, %arg1, %c0_i32 : i32
    %44 = arith.extui %43 : i1 to i32
    %c0_i32_24 = arith.constant 0 : i32
    %45 = arith.cmpi ne, %44, %c0_i32_24 : i32
    scf.if %45 {
      %cst_30 = arith.constant 0.000000e+00 : f32
      %52 = vector.broadcast %cst_30 : f32 to vector<8x32xf32>
      %c0_31 = arith.constant 0 : index
      %c0_32 = arith.constant 0 : index
      %53 = vector.load %arg10[%c0_31, %c0_32] : memref<8x32xf32, #tpu.memory_space<vmem>>, vector<8x32xf32>
      tpu.vector_store %arg10[%c0_31, %c0_32], %52 {strides = array<i32>} : memref<8x32xf32, #tpu.memory_space<vmem>>, vector<8x32xf32>,
    } else {
    }
    %c0_25 = arith.constant 0 : index
    %c0_26 = arith.constant 0 : index
    %46 = vector.load %arg10[%c0_25, %c0_26] : memref<8x32xf32, #tpu.memory_space<vmem>>, vector<8x32xf32>
    %47 = arith.addf %46, %42 : vector<8x32xf32>
    %c0_27 = arith.constant 0 : index
    %c0_28 = arith.constant 0 : index
    %48 = vector.load %arg10[%c0_27, %c0_28] : memref<8x32xf32, #tpu.memory_space<vmem>>, vector<8x32xf32>
    tpu.vector_store %arg10[%c0_27, %c0_28], %47 {strides = array<i32>} : memref<8x32xf32, #tpu.memory_space<vmem>>, vector<8x32xf32>,
    %c3_i32 = arith.constant 3 : i32
    %49 = arith.cmpi eq, %arg1, %c3_i32 : i32
    %50 = arith.extui %49 : i1 to i32
    %c0_i32_29 = arith.constant 0 : i32
    %51 = arith.cmpi ne, %50, %c0_i32_29 : i32
    scf.if %51 {
      %c0_30 = arith.constant 0 : index
      %c0_31 = arith.constant 0 : index
      %52 = vector.load %arg10[%c0_30, %c0_31] : memref<8x32xf32, #tpu.memory_space<vmem>>, vector<8x32xf32>
      %c0_32 = arith.constant 0 : index
      %c0_33 = arith.constant 0 : index
      %53 = vector.load %arg8[%c0_32, %c0_33] : memref<1x32xf32, #tpu.memory_space<vmem>>, vector<1x32xf32>
      %54 = vector.broadcast %53 : vector<1x32xf32> to vector<8x32xf32>
      %55 = arith.addf %52, %54 : vector<8x32xf32>
      %c0_34 = arith.constant 0 : index
      %c0_35 = arith.constant 0 : index
      %c0_36 = arith.constant 0 : index
      %56 = vector.load %arg9[%c0_34, %c0_35, %c0_36] : memref<1x8x32xf32, #tpu.memory_space<vmem>>, vector<1x8x32xf32>
      %57 = vector.shape_cast %56 : vector<1x8x32xf32> to vector<8x32xf32>
      %58 = vector.shape_cast %55 : vector<8x32xf32> to vector<1x8x32xf32>
      tpu.vector_store %arg9[%c0_34, %c0_35, %c0_36], %58 {strides = array<i32>} : memref<1x8x32xf32, #tpu.memory_space<vmem>>, vector<1x8x32xf32>,
    } else {
    }
    return
  }
  func.func @transform_0(%arg0: i32, %arg1: i32) -> (i32, i32, i32) {
    %c0_i32 = arith.constant 0 : i32
    %c0_i32_0 = arith.constant 0 : i32
    %c0_i32_1 = arith.constant 0 : i32
    return %arg0, %c0_i32, %c0_i32_0 : i32, i32, i32
  }
  func.func @transform_1(%arg0: i32, %arg1: i32) -> (i32, i32, i32) {
    %c0_i32 = arith.constant 0 : i32
    %c0_i32_0 = arith.constant 0 : i32
    %c0_i32_1 = arith.constant 0 : i32
    return %arg1, %c0_i32, %c0_i32_0 : i32, i32, i32
  }
  func.func @transform_2(%arg0: i32, %arg1: i32) -> (i32, i32, i32) {
    %c0_i32 = arith.constant 0 : i32
    %c0_i32_0 = arith.constant 0 : i32
    %c0_i32_1 = arith.constant 0 : i32
    return %arg1, %c0_i32, %c0_i32_0 : i32, i32, i32
  }
  func.func @transform_3(%arg0: i32, %arg1: i32) -> (i32, i32, i32) {
    %c0_i32 = arith.constant 0 : i32
    %c0_i32_0 = arith.constant 0 : i32
    %c0_i32_1 = arith.constant 0 : i32
    return %arg1, %c0_i32, %c0_i32_0 : i32, i32, i32
  }
  func.func @transform_4(%arg0: i32, %arg1: i32) -> (i32, i32, i32) {
    %c0_i32 = arith.constant 0 : i32
    %c0_i32_0 = arith.constant 0 : i32
    %c0_i32_1 = arith.constant 0 : i32
    return %arg1, %c0_i32, %c0_i32_0 : i32, i32, i32
  }
  func.func @transform_5(%arg0: i32, %arg1: i32) -> (i32, i32, i32) {
    %c0_i32 = arith.constant 0 : i32
    %c0_i32_0 = arith.constant 0 : i32
    %c0_i32_1 = arith.constant 0 : i32
    return %arg1, %c0_i32, %c0_i32_0 : i32, i32, i32
  }
  func.func @transform_6(%arg0: i32, %arg1: i32) -> (i32, i32) {
    %c0_i32 = arith.constant 0 : i32
    %c0_i32_0 = arith.constant 0 : i32
    %c0_i32_1 = arith.constant 0 : i32
    return %c0_i32, %c0_i32_0 : i32, i32
  }
  func.func @transform_7(%arg0: i32, %arg1: i32) -> (i32, i32, i32) {
    %c0_i32 = arith.constant 0 : i32
    %c0_i32_0 = arith.constant 0 : i32
    %c0_i32_1 = arith.constant 0 : i32
    return %arg0, %c0_i32, %c0_i32_0 : i32, i32, i32
  }
}

</mosaic_0001>

<llo_original>
// kernel: tpu_custom_call.1
$region0: #{tpu_custom_call.1}
  #allocation0 [shape = 'u32[]', space=smem, size = 0x4, offset = 0x4, fixed_abs, tag = 'smem constant byte address 0x4 - core index']
  #allocation1 [shape = 'u32[72,128]{1,0:T(1,128)}', space=vmem, size = 0x9000, scoped, tag = 'internal scratch']
  #allocation2 [shape = 'f32[8,32]{1,0:T(8,128)}', space=vmem, size = 0x1000, scoped, tag = 'scratch operand']
  %s0 = inlined_call_operand.vmem [shape: f32[2,8,32], index: 0, kind: input, shape index: {}]
  %s1 = inlined_call_operand.vmem [shape: bf16[4,32,8], index: 1, kind: input, shape index: {}]
  %s2 = inlined_call_operand.vmem [shape: bf16[4,32,8], index: 2, kind: input, shape index: {}]
  %s3 = inlined_call_operand.vmem [shape: bf16[4,32,8], index: 3, kind: input, shape index: {}]
  %s4 = inlined_call_operand.vmem [shape: f32[4,3,8], index: 4, kind: input, shape index: {}]
  %s5 = inlined_call_operand.vmem [shape: bf16[4,8,32], index: 5, kind: input, shape index: {}]
  %s6 = inlined_call_operand.vmem [shape: f32[1,32], index: 6, kind: input, shape index: {}]
  %s7 = inlined_call_operand.hbm [shape: f32[2,8,32], index: 7, kind: output, shape index: {}]
  %s8 = sld [smem:[#allocation0]]
  $region69: #{tpu_custom_call.1} parent=0
    _
  %s10 = ssub.s32 1, %s8
  %s11 = scalar_select 0, %s10, %s8
  $region1: #{tpu_custom_call.1} parent=0
    #allocation3 [shape = 'u8[8192]{0}', space=vmem, size = 0x2000, scoped, tag = 'output window, operand 0']
    #allocation4 [shape = 's32[2]{0}', space=sflag, size = 0x8, scoped, tag = 'scoped memory for tpu_custom_call.1']
    %12 = vsyncpa [#allocation4], 0
    %s13 = scalar_lea.sflag [#allocation4], 1
    %14 = vsyncpa %s13, 0
    loop: start=0, step=1, limit=10
    $region2: #{tpu_custom_call.1} parent=1 // loop_pre_header
      _
    $region3: #{tpu_custom_call.1} parent=1 // loop_header
      %s16 = sphi 0, %s20
      %p17 = scmp.ge.s32.totalorder %s16, 10
      %s23 = sphi 0, %s35
      %s24 = sphi 0, %s31
      %s25 = sphi 0, %s23
      %s26 = sphi 0, %s24
      %s27 = sphi 0, %s25
      %s28 = sphi 0, %s26
      %s38 = sphi 0, %s40
      %s41 = sphi 0, %s38
      %s42 = sphi 0, %s41
      %s58 = sphi 0, %s42
      %s64 = sphi 0, %s66
      %s67 = sphi 0, %s64
      %s68 = sphi 0, %s67
      %s84 = sphi 0, %s68
      %s90 = sphi 0, %s92
      %s93 = sphi 0, %s90
      %s94 = sphi 0, %s93
      %s110 = sphi 0, %s94
      %s116 = sphi 0, %s118
      %s119 = sphi 0, %s116
      %s120 = sphi 0, %s119
      %s136 = sphi 0, %s120
      %s142 = sphi 0, %s144
      %s145 = sphi 0, %s142
      %s146 = sphi 0, %s145
      %s162 = sphi 0, %s146
      %s168 = sphi 0, %s170
      %s171 = sphi 0, %s168
      %s172 = sphi 0, %s171
      %s188 = sphi 0, %s172
      %s192 = sphi 0, %s192
      %s194 = sphi 0, %s192
      %s195 = sphi 0, %s194
      %s209 = sphi 0, %s195
      %s215 = sphi 0, %s217
      %s218 = sphi 0, %s215
      %s219 = sphi 0, %s218
      %s235 = sphi 0, %s219
    $region4: #{tpu_custom_call.1} parent=1 // loop_header_branch
      %19 = sbr.rel (%p17) target = $region8
    $region5: #{tpu_custom_call.1} parent=1 // loop_body
      %s21 = ssub.s32 %s16, 1
      %s22 = ssub.s32 %s16, 2
      %s29 = sadd.s32 1, %s24
      %p30 = scmp.ge.s32.totalorder %s29, 4
      %s31 = scalar_select %p30, 0, %s29
      %s32 = sadd.s32 1, %s23
      %s33 = scalar_select %p30, %s32, %s23
      %p34 = scmp.ge.s32.totalorder %s33, 2
      %s35 = scalar_select %p34, 0, %s33
      %s36 = ssub.s32 %s23, %s35
      %p37 = scmp.eq.s32.totalorder %s36, 0
      %s39 = sadd.s32 %s38, 1
      %s40 = scalar_select %p37, %s38, %s39
      %p43 = pneg %p37
      %p44 = scmp.eq.s32.totalorder %s16, 7
      %p45 = por %p43, %p44
      %p46 = scmp.ne.s32.totalorder %s38, %s41
      %p47 = scmp.eq.s32.totalorder %s16, 0
      %p48 = por %p46, %p47
      %p49 = scmp.ne.s32.totalorder %s38, %s41
      %p50 = scmp.eq.s32.totalorder %s21, 7
      %p51 = por %p49, %p50
      %p52 = scmp.ne.s32.totalorder %s41, %s42
      %p53 = scmp.eq.s32.totalorder %s21, 0
      %p54 = por %p52, %p53
      %p55 = scmp.ne.s32.totalorder %s41, %s42
      %p56 = scmp.eq.s32.totalorder %s22, 7
      %p57 = por %p55, %p56
      %p59 = scmp.ne.s32.totalorder %s42, %s58
      %p60 = scmp.eq.s32.totalorder %s22, 0
      %p61 = por %p59, %p60
      %s62 = ssub.s32 %s24, %s31
      %p63 = scmp.eq.s32.totalorder %s62, 0
      %s65 = sadd.s32 %s64, 1
      %s66 = scalar_select %p63, %s64, %s65
      %p69 = pneg %p63
      %p70 = scmp.eq.s32.totalorder %s16, 7
      %p71 = por %p69, %p70
      %p72 = scmp.ne.s32.totalorder %s64, %s67
      %p73 = scmp.eq.s32.totalorder %s16, 0
      %p74 = por %p72, %p73
      %p75 = scmp.ne.s32.totalorder %s64, %s67
      %p76 = scmp.eq.s32.totalorder %s21, 7
      %p77 = por %p75, %p76
      %p78 = scmp.ne.s32.totalorder %s67, %s68
      %p79 = scmp.eq.s32.totalorder %s21, 0
      %p80 = por %p78, %p79
      %p81 = scmp.ne.s32.totalorder %s67, %s68
      %p82 = scmp.eq.s32.totalorder %s22, 7
      %p83 = por %p81, %p82
      %p85 = scmp.ne.s32.totalorder %s68, %s84
      %p86 = scmp.eq.s32.totalorder %s22, 0
      %p87 = por %p85, %p86
      %s88 = ssub.s32 %s24, %s31
      %p89 = scmp.eq.s32.totalorder %s88, 0
      %s91 = sadd.s32 %s90, 1
      %s92 = scalar_select %p89, %s90, %s91
      %p95 = pneg %p89
      %p96 = scmp.eq.s32.totalorder %s16, 7
      %p97 = por %p95, %p96
      %p98 = scmp.ne.s32.totalorder %s90, %s93
      %p99 = scmp.eq.s32.totalorder %s16, 0
      %p100 = por %p98, %p99
      %p101 = scmp.ne.s32.totalorder %s90, %s93
      %p102 = scmp.eq.s32.totalorder %s21, 7
      %p103 = por %p101, %p102
      %p104 = scmp.ne.s32.totalorder %s93, %s94
      %p105 = scmp.eq.s32.totalorder %s21, 0
      %p106 = por %p104, %p105
      %p107 = scmp.ne.s32.totalorder %s93, %s94
      %p108 = scmp.eq.s32.totalorder %s22, 7
      %p109 = por %p107, %p108
      %p111 = scmp.ne.s32.totalorder %s94, %s110
      %p112 = scmp.eq.s32.totalorder %s22, 0
      %p113 = por %p111, %p112
      %s114 = ssub.s32 %s24, %s31
      %p115 = scmp.eq.s32.totalorder %s114, 0
      %s117 = sadd.s32 %s116, 1
      %s118 = scalar_select %p115, %s116, %s117
      %p121 = pneg %p115
      %p122 = scmp.eq.s32.totalorder %s16, 7
      %p123 = por %p121, %p122
      %p124 = scmp.ne.s32.totalorder %s116, %s119
      %p125 = scmp.eq.s32.totalorder %s16, 0
      %p126 = por %p124, %p125
      %p127 = scmp.ne.s32.totalorder %s116, %s119
      %p128 = scmp.eq.s32.totalorder %s21, 7
      %p129 = por %p127, %p128
      %p130 = scmp.ne.s32.totalorder %s119, %s120
      %p131 = scmp.eq.s32.totalorder %s21, 0
      %p132 = por %p130, %p131
      %p133 = scmp.ne.s32.totalorder %s119, %s120
      %p134 = scmp.eq.s32.totalorder %s22, 7
      %p135 = por %p133, %p134
      %p137 = scmp.ne.s32.totalorder %s120, %s136
      %p138 = scmp.eq.s32.totalorder %s22, 0
      %p139 = por %p137, %p138
      %s140 = ssub.s32 %s24, %s31
      %p141 = scmp.eq.s32.totalorder %s140, 0
      %s143 = sadd.s32 %s142, 1
      %s144 = scalar_select %p141, %s142, %s143
      %p147 = pneg %p141
      %p148 = scmp.eq.s32.totalorder %s16, 7
      %p149 = por %p147, %p148
      %p150 = scmp.ne.s32.totalorder %s142, %s145
      %p151 = scmp.eq.s32.totalorder %s16, 0
      %p152 = por %p150, %p151
      %p153 = scmp.ne.s32.totalorder %s142, %s145
      %p154 = scmp.eq.s32.totalorder %s21, 7
      %p155 = por %p153, %p154
      %p156 = scmp.ne.s32.totalorder %s145, %s146
      %p157 = scmp.eq.s32.totalorder %s21, 0
      %p158 = por %p156, %p157
      %p159 = scmp.ne.s32.totalorder %s145, %s146
      %p160 = scmp.eq.s32.totalorder %s22, 7
      %p161 = por %p159, %p160
      %p163 = scmp.ne.s32.totalorder %s146, %s162
      %p164 = scmp.eq.s32.totalorder %s22, 0
      %p165 = por %p163, %p164
      %s166 = ssub.s32 %s24, %s31
      %p167 = scmp.eq.s32.totalorder %s166, 0
      %s169 = sadd.s32 %s168, 1
      %s170 = scalar_select %p167, %s168, %s169
      %p173 = pneg %p167
      %p174 = scmp.eq.s32.totalorder %s16, 7
      %p175 = por %p173, %p174
      %p176 = scmp.ne.s32.totalorder %s168, %s171
      %p177 = scmp.eq.s32.totalorder %s16, 0
      %p178 = por %p176, %p177
      %p179 = scmp.ne.s32.totalorder %s168, %s171
      %p180 = scmp.eq.s32.totalorder %s21, 7
      %p181 = por %p179, %p180
      %p182 = scmp.ne.s32.totalorder %s171, %s172
      %p183 = scmp.eq.s32.totalorder %s21, 0
      %p184 = por %p182, %p183
      %p185 = scmp.ne.s32.totalorder %s171, %s172
      %p186 = scmp.eq.s32.totalorder %s22, 7
      %p187 = por %p185, %p186
      %p189 = scmp.ne.s32.totalorder %s172, %s188
      %p190 = scmp.eq.s32.totalorder %s22, 0
      %p191 = por %p189, %p190
      %s193 = sadd.s32 %s192, 1
      %p196 = scmp.eq.s32.totalorder %s16, 7
      %p197 = scmp.ne.s32.totalorder %s192, %s194
      %p198 = scmp.eq.s32.totalorder %s16, 0
      %p199 = por %p197, %p198
      %p200 = scmp.ne.s32.totalorder %s192, %s194
      %p201 = scmp.eq.s32.totalorder %s21, 7
      %p202 = por %p200, %p201
      %p203 = scmp.ne.s32.totalorder %s194, %s195
      %p204 = scmp.eq.s32.totalorder %s21, 0
      %p205 = por %p203, %p204
      %p206 = scmp.ne.s32.totalorder %s194, %s195
      %p207 = scmp.eq.s32.totalorder %s22, 7
      %p208 = por %p206, %p207
      %p210 = scmp.ne.s32.totalorder %s195, %s209
      %p211 = scmp.eq.s32.totalorder %s22, 0
      %p212 = por %p210, %p211
      %s213 = ssub.s32 %s23, %s35
      %p214 = scmp.eq.s32.totalorder %s213, 0
      %s216 = sadd.s32 %s215, 1
      %s217 = scalar_select %p214, %s215, %s216
      %p220 = pneg %p214
      %p221 = scmp.eq.s32.totalorder %s16, 7
      %p222 = por %p220, %p221
      %p223 = scmp.ne.s32.totalorder %s215, %s218
      %p224 = scmp.eq.s32.totalorder %s16, 0
      %p225 = por %p223, %p224
      %p226 = scmp.ne.s32.totalorder %s215, %s218
      %p227 = scmp.eq.s32.totalorder %s21, 7
      %p228 = por %p226, %p227
      %p229 = scmp.ne.s32.totalorder %s218, %s219
      %p230 = scmp.eq.s32.totalorder %s21, 0
      %p231 = por %p229, %p230
      %p232 = scmp.ne.s32.totalorder %s218, %s219
      %p233 = scmp.eq.s32.totalorder %s22, 7
      %p234 = por %p232, %p233
      %p236 = scmp.ne.s32.totalorder %s219, %s235
      %p237 = scmp.eq.s32.totalorder %s22, 0
      %p238 = por %p236, %p237
      %p239 = scmp.le.s32.totalorder 1, %s16
      %p240 = scmp.lt.s32.totalorder %s16, 9
      %p241 = pnand %p239, %p240
      %p242 = pneg %p241
      // Predicated region
      $region9: #{tpu_custom_call.1} parent=5 // pred_check
        _
      $region10: #{tpu_custom_call.1} parent=5 // pred_check_branch
        %244 = sbr.rel (%p241) target = $region12
      $region11: #{tpu_custom_call.1} parent=5 // pred_region
        %s245 = ssub.s32 %s16, 1
        // Predicated region
        $region13: #{tpu_custom_call.1} parent=11 // pred_check
          %p246 = pneg %p205
        $region14: #{tpu_custom_call.1} parent=11 // pred_check_branch
          %248 = sbr.rel (%p246) target = $region16
        $region15: #{tpu_custom_call.1} parent=11 // pred_region
          _
        $region16: #{tpu_custom_call.1} parent=11 // pred_fallthru
          _
      $region12: #{tpu_custom_call.1} parent=5 // pred_fallthru
        _
      %p249 = scmp.lt.s32.totalorder %s16, 8
      // Predicated region
      $region17: #{tpu_custom_call.1} parent=5 // pred_check
        %p250 = pneg %p249
      $region18: #{tpu_custom_call.1} parent=5 // pred_check_branch
        %252 = sbr.rel (%p250) target = $region20
      $region19: #{tpu_custom_call.1} parent=5 // pred_region
        // Predicated region
        $region21: #{tpu_custom_call.1} parent=19 // pred_check
          %p253 = pneg %p48
        $region22: #{tpu_custom_call.1} parent=19 // pred_check_branch
          %255 = sbr.rel (%p253) target = $region24
        $region23: #{tpu_custom_call.1} parent=19 // pred_region
          %p256 = scmp.lt.s32.totalorder %s23, 1
          %s257 = scalar_select %p256, %s23, 1
          %s258 = smul.addr %s257, 8
          %s259 = scalar_lea.vmem %s0, %s258
        $region24: #{tpu_custom_call.1} parent=19 // pred_fallthru
          _
        // Predicated region
        $region25: #{tpu_custom_call.1} parent=19 // pred_check
          %p260 = pneg %p74
        $region26: #{tpu_custom_call.1} parent=19 // pred_check_branch
          %262 = sbr.rel (%p260) target = $region28
        $region27: #{tpu_custom_call.1} parent=19 // pred_region
          %p263 = scmp.lt.s32.totalorder %s24, 3
          %s264 = scalar_select %p263, %s24, 3
          %s265 = smul.addr %s264, 4
          %s266 = smul.addr %s265, 4
          %s267 = scalar_lea.vmem %s1, %s266
        $region28: #{tpu_custom_call.1} parent=19 // pred_fallthru
          _
        // Predicated region
        $region29: #{tpu_custom_call.1} parent=19 // pred_check
          %p268 = pneg %p100
        $region30: #{tpu_custom_call.1} parent=19 // pred_check_branch
          %270 = sbr.rel (%p268) target = $region32
        $region31: #{tpu_custom_call.1} parent=19 // pred_region
          %p271 = scmp.lt.s32.totalorder %s24, 3
          %s272 = scalar_select %p271, %s24, 3
          %s273 = smul.addr %s272, 4
          %s274 = smul.addr %s273, 4
          %s275 = scalar_lea.vmem %s2, %s274
        $region32: #{tpu_custom_call.1} parent=19 // pred_fallthru
          _
        // Predicated region
        $region33: #{tpu_custom_call.1} parent=19 // pred_check
          %p276 = pneg %p126
        $region34: #{tpu_custom_call.1} parent=19 // pred_check_branch
          %278 = sbr.rel (%p276) target = $region36
        $region35: #{tpu_custom_call.1} parent=19 // pred_region
          %p279 = scmp.lt.s32.totalorder %s24, 3
          %s280 = scalar_select %p279, %s24, 3
          %s281 = smul.addr %s280, 4
          %s282 = smul.addr %s281, 4
          %s283 = scalar_lea.vmem %s3, %s282
        $region36: #{tpu_custom_call.1} parent=19 // pred_fallthru
          _
        // Predicated region
        $region37: #{tpu_custom_call.1} parent=19 // pred_check
          %p284 = pneg %p152
        $region38: #{tpu_custom_call.1} parent=19 // pred_check_branch
          %286 = sbr.rel (%p284) target = $region40
        $region39: #{tpu_custom_call.1} parent=19 // pred_region
          %p287 = scmp.lt.s32.totalorder %s24, 3
          %s288 = scalar_select %p287, %s24, 3
          %s289 = smul.addr %s288, 4
          %s290 = scalar_lea.vmem %s4, %s289
        $region40: #{tpu_custom_call.1} parent=19 // pred_fallthru
          _
        // Predicated region
        $region41: #{tpu_custom_call.1} parent=19 // pred_check
          %p291 = pneg %p178
        $region42: #{tpu_custom_call.1} parent=19 // pred_check_branch
          %293 = sbr.rel (%p291) target = $region44
        $region43: #{tpu_custom_call.1} parent=19 // pred_region
          %p294 = scmp.lt.s32.totalorder %s24, 3
          %s295 = scalar_select %p294, %s24, 3
          %s296 = smul.addr %s295, 4
          %s297 = scalar_lea.vmem %s5, %s296
        $region44: #{tpu_custom_call.1} parent=19 // pred_fallthru
          _
      $region20: #{tpu_custom_call.1} parent=5 // pred_fallthru
        _
      %p298 = scmp.le.s32.totalorder 1, %s16
      %p299 = scmp.lt.s32.totalorder %s16, 9
      %p300 = pnand %p298, %p299
      %p301 = pneg %p300
      // Predicated region
      $region45: #{tpu_custom_call.1} parent=5 // pred_check
        _
      $region46: #{tpu_custom_call.1} parent=5 // pred_check_branch
        %303 = sbr.rel (%p300) target = $region48
      $region47: #{tpu_custom_call.1} parent=5 // pred_region
        %s304 = ssub.s32 %s16, 1
        %p305 = scmp.lt.s32.totalorder %s25, 1
        %s306 = scalar_select %p305, %s25, 1
        %s307 = smul.addr %s306, 8
        %s308 = scalar_lea.vmem %s0, %s307
        %p309 = pneg %p54
        %p310 = pneg %p51
        %p311 = scmp.lt.s32.totalorder %s26, 3
        %s312 = scalar_select %p311, %s26, 3
        %s313 = smul.addr %s312, 4
        %s314 = smul.addr %s313, 4
        %s315 = scalar_lea.vmem %s1, %s314
        %p316 = pneg %p80
        %p317 = pneg %p77
        %p318 = scmp.lt.s32.totalorder %s26, 3
        %s319 = scalar_select %p318, %s26, 3
        %s320 = smul.addr %s319, 4
        %s321 = smul.addr %s320, 4
        %s322 = scalar_lea.vmem %s2, %s321
        %p323 = pneg %p106
        %p324 = pneg %p103
        %p325 = scmp.lt.s32.totalorder %s26, 3
        %s326 = scalar_select %p325, %s26, 3
        %s327 = smul.addr %s326, 4
        %s328 = smul.addr %s327, 4
        %s329 = scalar_lea.vmem %s3, %s328
        %p330 = pneg %p132
        %p331 = pneg %p129
        %p332 = scmp.lt.s32.totalorder %s26, 3
        %s333 = scalar_select %p332, %s26, 3
        %s334 = smul.addr %s333, 4
        %s335 = scalar_lea.vmem %s4, %s334
        %p336 = pneg %p158
        %p337 = pneg %p155
        %p338 = scmp.lt.s32.totalorder %s26, 3
        %s339 = scalar_select %p338, %s26, 3
        %s340 = smul.addr %s339, 4
        %s341 = scalar_lea.vmem %s5, %s340
        %p342 = pneg %p184
        %p343 = pneg %p181
        %p344 = pneg %p205
        %p345 = pneg %p202
        %p346 = pneg %p231
        %p347 = pneg %p228
        %s348 = sand.u32 %s218, 1
        %s349 = scalar_lea.sflag [#allocation4], %s348
        %s350 = sand.u32 %s218, 1
        %s351 = smul.addr %s350, 8
        %s352 = scalar_lea.vmem [#allocation3], %s351
        %p353 = scmp.lt.s32.totalorder %s25, 1
        %s354 = scalar_select %p353, %s25, 1
        %s355 = smul.addr %s354, 8
        %s356 = scalar_lea.vmem %s0, %s355
        %p357 = scmp.lt.s32.totalorder %s26, 3
        %s358 = scalar_select %p357, %s26, 3
        %s359 = smul.addr %s358, 4
        %s360 = smul.addr %s359, 4
        %s361 = scalar_lea.vmem %s1, %s360
        %p362 = scmp.lt.s32.totalorder %s26, 3
        %s363 = scalar_select %p362, %s26, 3
        %s364 = smul.addr %s363, 4
        %s365 = smul.addr %s364, 4
        %s366 = scalar_lea.vmem %s2, %s365
        %p367 = scmp.lt.s32.totalorder %s26, 3
        %s368 = scalar_select %p367, %s26, 3
        %s369 = smul.addr %s368, 4
        %s370 = smul.addr %s369, 4
        %s371 = scalar_lea.vmem %s3, %s370
        %p372 = scmp.lt.s32.totalorder %s26, 3
        %s373 = scalar_select %p372, %s26, 3
        %s374 = smul.addr %s373, 4
        %s375 = scalar_lea.vmem %s4, %s374
        %p376 = scmp.lt.s32.totalorder %s26, 3
        %s377 = scalar_select %p376, %s26, 3
        %s378 = smul.addr %s377, 4
        %s379 = scalar_lea.vmem %s5, %s378
        %v381 = vld [vmem:[%s356] sm:$0xff]
        %v382 = vpack.c.bf16 %v381, %v381
        %v383 = vld [vmem:[%s375] sm:$0x7]
        %v384 = vld [vmem:[%s361] sm:$0xf]
        %v385 = vld [vmem:[%s361 + $0x4] sm:$0xf]
        %v386 = vld [vmem:[%s361 + $0x8] sm:$0xf]
        %v387 = vld [vmem:[%s361 + $0xc] sm:$0xf]
        %v388 = vperm.slane %v383, 0
        %v393 = vunpack.c.l.b16 %v384
        %v394 = vunpack.c.l.b16 %v385
        %v395 = vunpack.c.l.b16 %v386
        %v396 = vunpack.c.l.b16 %v387
        %v397 = vpack.c.b16 %v394, %v393
        %v398 = vpack.c.b16 %v396, %v395
        %vm401 = vcmask 261120
        %v403 = vsel %vm401, %v382, 0
        %405 = vmatpush.bf16.msra.mxu0 0
        %406 = vmatpush.bf16.msra.mxu0 0
        %407 = vmatpush.bf16.msra.mxu0 0
        %408 = vmatpush.bf16.msra.mxu0 0
        %409 = vmatpush.bf16.msra.mxu0 0
        %410 = vmatpush.bf16.msra.mxu0 0
        %411 = vmatpush.bf16.msra.mxu0 %v398
        %412 = vmatpush.bf16.msra.mxu0 %v397
        %413 = vmatmul.bf16.gmra.mxu0 %v403
        %v414 = vpop.f32.mrf.mxu0
        %v415 = vadd.f32 %v388, %v414
        %v416 = vpop.f32.mrf.mxu0
        %417 = vdwg.mxu0
        %v418 = vld [vmem:[%s366] sm:$0xf]
        %v419 = vld [vmem:[%s366 + $0x4] sm:$0xf]
        %v420 = vld [vmem:[%s366 + $0x8] sm:$0xf]
        %v421 = vld [vmem:[%s366 + $0xc] sm:$0xf]
        %v422 = vperm.slane %v383, 1
        %v427 = vunpack.c.l.b16 %v418
        %v428 = vunpack.c.l.b16 %v419
        %v429 = vunpack.c.l.b16 %v420
        %v430 = vunpack.c.l.b16 %v421
        %v431 = vpack.c.b16 %v428, %v427
        %v432 = vpack.c.b16 %v430, %v429
        %435 = vmatpush.bf16.msra.mxu0 0
        %436 = vmatpush.bf16.msra.mxu0 0
        %437 = vmatpush.bf16.msra.mxu0 0
        %438 = vmatpush.bf16.msra.mxu0 0
        %439 = vmatpush.bf16.msra.mxu0 0
        %440 = vmatpush.bf16.msra.mxu0 0
        %441 = vmatpush.bf16.msra.mxu0 %v432
        %442 = vmatpush.bf16.msra.mxu0 %v431
        %443 = vmatmul.bf16.gmra.mxu0 %v403
        %v444 = vpop.f32.mrf.mxu0
        %v445 = vadd.f32 %v422, %v444
        %v446 = vpop.f32.mrf.mxu0
        %447 = vdwg.mxu0
        %v448 = vld [vmem:[%s371] sm:$0xf]
        %v449 = vld [vmem:[%s371 + $0x4] sm:$0xf]
        %v450 = vld [vmem:[%s371 + $0x8] sm:$0xf]
        %v451 = vld [vmem:[%s371 + $0xc] sm:$0xf]
        %v452 = vperm.slane %v383, 2
        %v457 = vunpack.c.l.b16 %v448
        %v458 = vunpack.c.l.b16 %v449
        %v459 = vunpack.c.l.b16 %v450
        %v460 = vunpack.c.l.b16 %v451
        %v461 = vpack.c.b16 %v458, %v457
        %v462 = vpack.c.b16 %v460, %v459
        %465 = vmatpush.bf16.msra.mxu0 0
        %466 = vmatpush.bf16.msra.mxu0 0
        %467 = vmatpush.bf16.msra.mxu0 0
        %468 = vmatpush.bf16.msra.mxu0 0
        %469 = vmatpush.bf16.msra.mxu0 0
        %470 = vmatpush.bf16.msra.mxu0 0
        %471 = vmatpush.bf16.msra.mxu0 %v462
        %472 = vmatpush.bf16.msra.mxu0 %v461
        %473 = vmatmul.bf16.gmra.mxu0 %v403
        %v474 = vpop.f32.mrf.mxu0
        %v475 = vadd.f32 %v452, %v474
        %v476 = vpop.f32.mrf.mxu0
        %477 = vdwg.mxu0
        %v478 = vpack.c.bf16 %v415, %v415
        %v479 = vpack.c.bf16 %v445, %v445
        %vm480 = vcmask 64512
        %v482 = vsel %vm480, %v478, 0
        %v485 = vsel %vm480, %v479, 0
        %487 = vmatpush.bf16.xpose.msra.mxu0 0
        %488 = vmatpush.bf16.xpose.msra.mxu0 0
        %489 = vmatpush.bf16.xpose.msra.mxu0 0
        %490 = vmatpush.bf16.xpose.msra.mxu0 0
        %491 = vmatpush.bf16.xpose.msra.mxu0 0
        %492 = vmatpush.bf16.xpose.msra.mxu0 0
        %493 = vmatpush.bf16.xpose.msra.mxu0 0
        %494 = vmatpush.bf16.xpose.msra.mxu0 %v485
        %495 = vmatmul.bf16.gmra.mxu0 %v482
        %v496 = vpop.f32.mrf.mxu0
        %v497 = vadd.f32 0.0, %v496
        %v498 = vpop.f32.mrf.mxu0
        %499 = vdwg.mxu0
        %v500 = vsel %vm480, %v497, -inf
        %501 = vmax.xlane.f32.xlu0 %v500
        %v502 = vpop.xlane.xlu0 %501
        %v503 = vsub.f32 %v497, %v502
        %v504 = vmul.f32 %v503, 1.442695
        %v505 = vpow.pop %v504
        %v506 = vsel %vm480, %v505, 0.0
        %507 = vadd.xlane.f32.xlu0 %v506
        %v508 = vpop.xlane.xlu0 %507
        %v509 = vrcp.pop %v508
        %v510 = vpack.c.bf16 %v505, %v505
        %v511 = vpack.c.bf16 %v475, %v475
        %v513 = vsel %vm480, %v510, 0
        %vm515 = vcmask 1043456
        %v517 = vsel %vm515, %v511, 0
        %519 = vmatpush.bf16.msra.mxu0 0
        %520 = vmatpush.bf16.msra.mxu0 0
        %521 = vmatpush.bf16.msra.mxu0 0
        %522 = vmatpush.bf16.msra.mxu0 0
        %523 = vmatpush.bf16.msra.mxu0 0
        %524 = vmatpush.bf16.msra.mxu0 0
        %525 = vmatpush.bf16.msra.mxu0 0
        %526 = vmatpush.bf16.msra.mxu0 %v517
        %527 = vmatmul.bf16.gmra.mxu0 %v513
        %v528 = vpop.f32.mrf.mxu0
        %v529 = vadd.f32 0.0, %v528
        %v530 = vpop.f32.mrf.mxu0
        %531 = vdwg.mxu0
        %v532 = vmul.f32 %v529, %v509
        %v533 = vpack.c.bf16 %v532, %v532
        %v534 = vld [vmem:[%s379] sm:$0xf]
        %v536 = vsel %vm480, %v533, 0
        %v539 = vsel %vm515, %v534, 0
        %541 = vmatpush.bf16.msra.mxu0 0
        %542 = vmatpush.bf16.msra.mxu0 0
        %543 = vmatpush.bf16.msra.mxu0 0
        %544 = vmatpush.bf16.msra.mxu0 0
        %545 = vmatpush.bf16.msra.mxu0 0
        %546 = vmatpush.bf16.msra.mxu0 0
        %547 = vmatpush.bf16.msra.mxu0 0
        %548 = vmatpush.bf16.msra.mxu0 %v539
        %549 = vmatmul.bf16.gmra.mxu0 %v536
        %v550 = vpop.f32.mrf.mxu0
        %v551 = vadd.f32 0.0, %v550
        %v552 = vpop.f32.mrf.mxu0
        %553 = vdwg.mxu0
        %p554 = scmp.eq.s32.totalorder %s26, 0
        // Predicated region
        $region49: #{tpu_custom_call.1} parent=47 // pred_check
          %p555 = pneg %p554
        $region50: #{tpu_custom_call.1} parent=47 // pred_check_branch
          %557 = sbr.rel (%p555) target = $region52
        $region51: #{tpu_custom_call.1} parent=47 // pred_region
          %558 = vst.msk [vmem:[#allocation2] sm:$0xff] %vm401, 0.0
        $region52: #{tpu_custom_call.1} parent=47 // pred_fallthru
          _
        %v559 = vld [vmem:[#allocation2] sm:$0xff]
        %v560 = vadd.f32 %v559, %v551
        %561 = vst.msk [vmem:[#allocation2] sm:$0xff] %vm401, %v560
        %p562 = scmp.eq.s32.totalorder %s26, 3
        // Predicated region
        $region53: #{tpu_custom_call.1} parent=47 // pred_check
          %p563 = pneg %p562
        $region54: #{tpu_custom_call.1} parent=47 // pred_check_branch
          %565 = sbr.rel (%p563) target = $region56
        $region55: #{tpu_custom_call.1} parent=47 // pred_region
          %v566 = vld [vmem:[#allocation2] sm:$0xff]
          %v567 = vld [vmem:[%s6] sm:$0x1]
          %v569 = vperm.slane %v567, 0
          %v571 = vadd.f32 %v566, %v569
          %572 = vst.msk [vmem:[%s352] sm:$0xff] %vm401, %v571
        $region56: #{tpu_custom_call.1} parent=47 // pred_fallthru
          _
        %s573 = sand.u32 %s218, 1
        %s574 = scalar_lea.sflag [#allocation4], %s573
        %s575 = sand.u32 %s218, 1
        %s576 = smul.addr %s575, 8
        %s577 = scalar_lea.vmem [#allocation3], %s576
        // Predicated region
        $region57: #{tpu_custom_call.1} parent=47 // pred_check
          %p578 = pneg %p228
        $region58: #{tpu_custom_call.1} parent=47 // pred_check_branch
          %580 = sbr.rel (%p578) target = $region60
        $region59: #{tpu_custom_call.1} parent=47 // pred_region
          %582 = vsyncadd %s574, 0
          %s583 = smul.addr %s25, 8
          %s584 = scalar_lea.hbm %s7, %s583
          %s586 = sshll.u32 %s577, 4
          %s587 = int_to_ptr.vmem [resolvable:$true] %s586
          %s588 = sshll.u32 %s584, 4
          %s589 = int_to_ptr.hbm [resolvable:$true] %s588
          %591 = dma.vmem_to_hbm [thread:$0]  %s587, 128, %s589, %s574
        $region60: #{tpu_custom_call.1} parent=47 // pred_fallthru
          _
      $region48: #{tpu_custom_call.1} parent=5 // pred_fallthru
        _
      %p592 = scmp.le.s32.totalorder 2, %s16
      // Predicated region
      $region61: #{tpu_custom_call.1} parent=5 // pred_check
        %p593 = pneg %p592
      $region62: #{tpu_custom_call.1} parent=5 // pred_check_branch
        %595 = sbr.rel (%p593) target = $region64
      $region63: #{tpu_custom_call.1} parent=5 // pred_region
        %s596 = ssub.s32 %s16, 2
        // Predicated region
        $region65: #{tpu_custom_call.1} parent=63 // pred_check
          %p597 = pneg %p234
        $region66: #{tpu_custom_call.1} parent=63 // pred_check_branch
          %599 = sbr.rel (%p597) target = $region68
        $region67: #{tpu_custom_call.1} parent=63 // pred_region
          %s600 = sand.u32 %s219, 1
          %s601 = scalar_lea.sflag [#allocation4], %s600
          %s602 = sand.u32 %s219, 1
          %s603 = smul.addr %s602, 8
          %s604 = scalar_lea.vmem [#allocation3], %s603
          %606 = dma.done %s601, 128
        $region68: #{tpu_custom_call.1} parent=63 // pred_fallthru
          _
      $region64: #{tpu_custom_call.1} parent=5 // pred_fallthru
        _
    $region6: #{tpu_custom_call.1} parent=1 // loop_footer
      %s20 = sadd.s32 1, %s16
    $region7: #{tpu_custom_call.1} parent=1 // loop_footer_branch
      %15 = sbr.rel target = $region3
    $region8: #{tpu_custom_call.1} parent=1 // loop_exit
      _
    %607 = vsyncpa [#allocation4], 1
    %s608 = scalar_lea.sflag [#allocation4], 1
    %609 = vsyncpa %s608, 1

</llo_original>
